<compile_context>
chip_gen: v6e
topology: v6e:2x2x1
jax: 0.10.0
libtpu: 0.0.40
codegen_flags: <defaults>
</compile_context>

<pallas_src>
import jax
import jax.numpy as jnp
from jax.experimental import pallas as pl
from jax.experimental.pallas import tpu as pltpu


def _mlp_kernel(x_ref, w1_ref, b1_ref, w2_ref, b2_ref, w3_ref, b3_ref, o_ref):
    # Cast the streamed activation tile to the weights' compute dtype (bf16) in VMEM.
    x = x_ref[...].astype(w1_ref.dtype)
    # linear1 + relu  (bf16 MXU matmul, f32 accumulate / bias / relu)
    h1 = jnp.dot(x, w1_ref[...], preferred_element_type=jnp.float32) + b1_ref[...]
    h1 = jnp.maximum(h1, 0.0)
    # linear2 + relu
    h2 = jnp.dot(h1.astype(w2_ref.dtype), w2_ref[...],
                 preferred_element_type=jnp.float32) + b2_ref[...]
    h2 = jnp.maximum(h2, 0.0)
    # linear3 (no activation)
    out = jnp.dot(h2.astype(w3_ref.dtype), w3_ref[...],
                  preferred_element_type=jnp.float32) + b3_ref[...]
    o_ref[...] = out.astype(o_ref.dtype)


def _round_up(n, m):
    return ((n + m - 1) // m) * m


def mlp_forward(x, params, input_dim, *, compute_dtype=jnp.bfloat16, block_b=None):
    """Forward matching torch: relu(l1(x.view(-1, input_dim))) -> relu(l2) -> l3."""
    w1, b1, w2, b2, w3, b3 = params
    xf = x.reshape(-1, input_dim)            # matches torch's x.view(-1, input_dim)
    B = xf.shape[0]
    result_dtype = x.dtype

    # Pre-cast params only if the caller didn't (Python-level checks => zero per-call
    # convert ops when init_mlp_params already stored them in the kernel dtypes).
    if w1.dtype != compute_dtype:
        w1, w2, w3 = (w.astype(compute_dtype) for w in (w1, w2, w3))
    if b1.dtype != jnp.float32:
        b1, b2, b3 = (b.astype(jnp.float32) for b in (b1, b2, b3))
    as_row = lambda b: b if b.ndim == 2 else b.reshape(1, -1)
    b1, b2, b3 = as_row(b1), as_row(b2), as_row(b3)

    hidden = w1.shape[1]
    out_dim = w3.shape[1]

    # Lane-dense output: pad the final feature dim up to a multiple of 128 (tiny weight op).
    out_pad = max(128, _round_up(out_dim, 128))
    if out_pad != out_dim:
        w3 = jnp.pad(w3, ((0, 0), (0, out_pad - out_dim)))
        b3 = jnp.pad(b3, ((0, 0), (0, out_pad - out_dim)))

    out_store_dtype = jnp.bfloat16  # halves writeback of the (mostly padding) output tile

    # Batch tile. B <= 256 -> single full-batch block (block == full dim, so the (8,128)
    # divisibility rule doesn't apply). Otherwise pick a multiple of 256 (fills MXU M on
    # v6e/v7x, multiple of 128 for v5e) that (a) keeps the double-buffered x/out tiles
    # within a VMEM budget and (b) gives >= 2 blocks so the "parallel" batch axis shards
    # across v7x's two TensorCores.
    if block_b is None:
        if B <= 256:
            block_b = B
        else:
            per_row_bytes = (2 * input_dim * xf.dtype.itemsize   # x tile, double-buffered
                             + 2 * out_pad * 2)                  # bf16 out tile, double-buffered
            budget = 32 << 20                                    # << 48 MiB scoped VMEM limit
            cap = max(256, min(2048, (budget // per_row_bytes) // 256 * 256))
            block_b = min(cap, _round_up(pl.cdiv(B, 2), 256))
    nb = pl.cdiv(B, block_b)         # ragged last block is masked by Pallas

    const = lambda shape: pl.BlockSpec(shape, lambda i: (0, 0))  # VMEM-resident weights

    out = pl.pallas_call(
        _mlp_kernel,
        out_shape=jax.ShapeDtypeStruct((B, out_pad), out_store_dtype),
        grid_spec=pltpu.PrefetchScalarGridSpec(
            num_scalar_prefetch=0,
            grid=(nb,),
            in_specs=[
                pl.BlockSpec((block_b, input_dim), lambda i: (i, 0)),   # x: tiled over batch
                const((input_dim, hidden)),                             # w1
                const((1, hidden)),                                     # b1
                const((hidden, hidden)),                                # w2
                const((1, hidden)),                                     # b2
                const((hidden, out_pad)),                               # w3 (lane-padded)
                const((1, out_pad)),                                    # b3 (lane-padded)
            ],
            out_specs=pl.BlockSpec((block_b, out_pad), lambda i: (i, 0)),
        ),
        compiler_params=pltpu.CompilerParams(
            dimension_semantics=("parallel",),      # megacore sharding on v7x
            vmem_limit_bytes=48 << 20,              # headroom under v7x's 64 MiB VMEM
        ),
    )(xf, w1, b1, w2, b2, w3, b3)

    # Tiny slice + cast back to the caller's dtype (B x out_dim only).
    return out[:, :out_dim].astype(result_dtype)


def init_mlp_params(key, input_dim, hidden_dim, output_dim, *, compute_dtype=jnp.bfloat16):
    """Matches the module's reset(): xavier_uniform_ weights, zero biases.
    Weights are stored transposed (in_features, out_features) and pre-cast to the kernel
    compute dtype; biases are stored (1, out_features) in f32 (added to the f32 accumulator),
    so the forward path issues no per-call convert ops."""
    def xavier(k, fan_in, fan_out):
        bound = (6.0 / (fan_in + fan_out)) ** 0.5
        # torch weight is (out, in); sample that shape then transpose for x @ W.
        w = jax.random.uniform(k, (fan_out, fan_in), jnp.float32, minval=-bound, maxval=bound)
        return w.T.astype(compute_dtype)

    k1, k2, k3 = jax.random.split(key, 3)
    w1 = xavier(k1, input_dim, hidden_dim)
    b1 = jnp.zeros((1, hidden_dim), jnp.float32)
    w2 = xavier(k2, hidden_dim, hidden_dim)
    b2 = jnp.zeros((1, hidden_dim), jnp.float32)
    w3 = xavier(k3, hidden_dim, output_dim)
    b3 = jnp.zeros((1, output_dim), jnp.float32)
    return (w1, b1, w2, b2, w3, b3)


if __name__ == "__main__":
    # Small shapes consistent with the module's forward: x flattens to input_dim.
    batch, C, H, W = 2, 4, 16, 16
    input_dim = C * H * W            # 1024
    hidden_dim = 128
    output_dim = 10

    key = jax.random.PRNGKey(0)
    kx, kp = jax.random.split(key)
    x = jax.random.normal(kx, (batch, C, H, W), jnp.float32)
    params = init_mlp_params(kp, input_dim, hidden_dim, output_dim)

    out = mlp_forward(x, params, input_dim)
    out = jax.block_until_ready(out)
    assert out.shape == (batch, output_dim)
    assert out.dtype == x.dtype

    # Plain-JAX reference with the same bf16-compute / f32-accumulate / bf16-store recipe.
    w1, b1, w2, b2, w3, b3 = params   # weights bf16, biases f32 (1, N)
    xf = x.reshape(-1, input_dim).astype(jnp.bfloat16)
    h1 = jnp.maximum(jnp.dot(xf, w1, preferred_element_type=jnp.float32) + b1, 0.0)
    h2 = jnp.maximum(jnp.dot(h1.astype(jnp.bfloat16), w2,
                             preferred_element_type=jnp.float32) + b2, 0.0)
    ref = jnp.dot(h2.astype(jnp.bfloat16), w3, preferred_element_type=jnp.float32) + b3
    ref = ref.astype(jnp.bfloat16).astype(jnp.float32)   # mirror the kernel's bf16 writeback

    assert jnp.allclose(out, ref, atol=1e-2, rtol=1e-2), float(jnp.max(jnp.abs(out - ref)))
    print("KERNEL_OK")
</pallas_src>

<mosaic_0001>
module attributes {stable_mosaic.version = 11 : i64} {
  func.func @_mlp_kernel(%arg0: i32, %arg1: memref<2x1024xf32, #tpu.memory_space<vmem>>, %arg2: memref<1024x128xbf16, #tpu.memory_space<vmem>>, %arg3: memref<1x128xf32, #tpu.memory_space<vmem>>, %arg4: memref<128x128xbf16, #tpu.memory_space<vmem>>, %arg5: memref<1x128xf32, #tpu.memory_space<vmem>>, %arg6: memref<128x128xbf16, #tpu.memory_space<vmem>>, %arg7: memref<1x128xf32, #tpu.memory_space<vmem>>, %arg8: memref<2x128xbf16, #tpu.memory_space<vmem>>) attributes {dimension_semantics = [#tpu.dimension_semantics<parallel>], iteration_bounds = array<i64: 1>, scalar_prefetch = 0 : i64, scratch_operands = 0 : i64, tpu.core_type = #tpu.core_type<tc>, window_params = [{transform_indices = @transform_0, window_bounds = array<i64: 2, 1024>}, {pipeline_mode = #tpu.pipeline_mode<synchronous>, transform_indices = @transform_1, window_bounds = array<i64: 1024, 128>}, {pipeline_mode = #tpu.pipeline_mode<synchronous>, transform_indices = @transform_2, window_bounds = array<i64: 1, 128>}, {pipeline_mode = #tpu.pipeline_mode<synchronous>, transform_indices = @transform_3, window_bounds = array<i64: 128, 128>}, {pipeline_mode = #tpu.pipeline_mode<synchronous>, transform_indices = @transform_4, window_bounds = array<i64: 1, 128>}, {pipeline_mode = #tpu.pipeline_mode<synchronous>, transform_indices = @transform_5, window_bounds = array<i64: 128, 128>}, {pipeline_mode = #tpu.pipeline_mode<synchronous>, transform_indices = @transform_6, window_bounds = array<i64: 1, 128>}, {transform_indices = @transform_7, window_bounds = array<i64: 2, 128>}]} {
    %c0 = arith.constant 0 : index
    %c0_0 = arith.constant 0 : index
    %0 = vector.load %arg1[%c0, %c0_0] : memref<2x1024xf32, #tpu.memory_space<vmem>>, vector<2x1024xf32>
    %1 = arith.truncf %0 : vector<2x1024xf32> to vector<2x1024xbf16>
    %c0_1 = arith.constant 0 : index
    %c0_2 = arith.constant 0 : index
    %2 = vector.load %arg2[%c0_1, %c0_2] : memref<1024x128xbf16, #tpu.memory_space<vmem>>, vector<1024x128xbf16>
    %cst = arith.constant dense<0.000000e+00> : vector<2x128xf32>
    %3 = tpu.matmul %1, %2, %cst {dimension_numbers = #tpu.dot_dimension_numbers<[1], [0], [0], [1], [0, 0, 1, 1], [], []>} : vector<2x1024xbf16>, vector<1024x128xbf16>, vector<2x128xf32> -> vector<2x128xf32>
    %c0_3 = arith.constant 0 : index
    %c0_4 = arith.constant 0 : index
    %4 = vector.load %arg3[%c0_3, %c0_4] : memref<1x128xf32, #tpu.memory_space<vmem>>, vector<1x128xf32>
    %5 = vector.broadcast %4 : vector<1x128xf32> to vector<2x128xf32>
    %6 = arith.addf %3, %5 : vector<2x128xf32>
    %cst_5 = arith.constant 0.000000e+00 : f32
    %7 = vector.broadcast %cst_5 : f32 to vector<2x128xf32>
    %8 = arith.maximumf %6, %7 : vector<2x128xf32>
    %9 = arith.truncf %8 : vector<2x128xf32> to vector<2x128xbf16>
    %c0_6 = arith.constant 0 : index
    %c0_7 = arith.constant 0 : index
    %10 = vector.load %arg4[%c0_6, %c0_7] : memref<128x128xbf16, #tpu.memory_space<vmem>>, vector<128x128xbf16>
    %cst_8 = arith.constant dense<0.000000e+00> : vector<2x128xf32>
    %11 = tpu.matmul %9, %10, %cst_8 {dimension_numbers = #tpu.dot_dimension_numbers<[1], [0], [0], [1], [0, 0, 1, 1], [], []>} : vector<2x128xbf16>, vector<128x128xbf16>, vector<2x128xf32> -> vector<2x128xf32>
    %c0_9 = arith.constant 0 : index
    %c0_10 = arith.constant 0 : index
    %12 = vector.load %arg5[%c0_9, %c0_10] : memref<1x128xf32, #tpu.memory_space<vmem>>, vector<1x128xf32>
    %13 = vector.broadcast %12 : vector<1x128xf32> to vector<2x128xf32>
    %14 = arith.addf %11, %13 : vector<2x128xf32>
    %cst_11 = arith.constant 0.000000e+00 : f32
    %15 = vector.broadcast %cst_11 : f32 to vector<2x128xf32>
    %16 = arith.maximumf %14, %15 : vector<2x128xf32>
    %17 = arith.truncf %16 : vector<2x128xf32> to vector<2x128xbf16>
    %c0_12 = arith.constant 0 : index
    %c0_13 = arith.constant 0 : index
    %18 = vector.load %arg6[%c0_12, %c0_13] : memref<128x128xbf16, #tpu.memory_space<vmem>>, vector<128x128xbf16>
    %cst_14 = arith.constant dense<0.000000e+00> : vector<2x128xf32>
    %19 = tpu.matmul %17, %18, %cst_14 {dimension_numbers = #tpu.dot_dimension_numbers<[1], [0], [0], [1], [0, 0, 1, 1], [], []>} : vector<2x128xbf16>, vector<128x128xbf16>, vector<2x128xf32> -> vector<2x128xf32>
    %c0_15 = arith.constant 0 : index
    %c0_16 = arith.constant 0 : index
    %20 = vector.load %arg7[%c0_15, %c0_16] : memref<1x128xf32, #tpu.memory_space<vmem>>, vector<1x128xf32>
    %21 = vector.broadcast %20 : vector<1x128xf32> to vector<2x128xf32>
    %22 = arith.addf %19, %21 : vector<2x128xf32>
    %23 = arith.truncf %22 : vector<2x128xf32> to vector<2x128xbf16>
    %c0_17 = arith.constant 0 : index
    %c0_18 = arith.constant 0 : index
    %24 = vector.load %arg8[%c0_17, %c0_18] : memref<2x128xbf16, #tpu.memory_space<vmem>>, vector<2x128xbf16>
    tpu.vector_store %arg8[%c0_17, %c0_18], %23 {strides = array<i32>} : memref<2x128xbf16, #tpu.memory_space<vmem>>, vector<2x128xbf16>,
    return
  }
  func.func @transform_0(%arg0: i32) -> (i32, i32) {
    %c0_i32 = arith.constant 0 : i32
    %c0_i32_0 = arith.constant 0 : i32
    return %arg0, %c0_i32 : i32, i32
  }
  func.func @transform_1(%arg0: i32) -> (i32, i32) {
    %c0_i32 = arith.constant 0 : i32
    %c0_i32_0 = arith.constant 0 : i32
    %c0_i32_1 = arith.constant 0 : i32
    return %c0_i32, %c0_i32_0 : i32, i32
  }
  func.func @transform_2(%arg0: i32) -> (i32, i32) {
    %c0_i32 = arith.constant 0 : i32
    %c0_i32_0 = arith.constant 0 : i32
    %c0_i32_1 = arith.constant 0 : i32
    return %c0_i32, %c0_i32_0 : i32, i32
  }
  func.func @transform_3(%arg0: i32) -> (i32, i32) {
    %c0_i32 = arith.constant 0 : i32
    %c0_i32_0 = arith.constant 0 : i32
    %c0_i32_1 = arith.constant 0 : i32
    return %c0_i32, %c0_i32_0 : i32, i32
  }
  func.func @transform_4(%arg0: i32) -> (i32, i32) {
    %c0_i32 = arith.constant 0 : i32
    %c0_i32_0 = arith.constant 0 : i32
    %c0_i32_1 = arith.constant 0 : i32
    return %c0_i32, %c0_i32_0 : i32, i32
  }
  func.func @transform_5(%arg0: i32) -> (i32, i32) {
    %c0_i32 = arith.constant 0 : i32
    %c0_i32_0 = arith.constant 0 : i32
    %c0_i32_1 = arith.constant 0 : i32
    return %c0_i32, %c0_i32_0 : i32, i32
  }
  func.func @transform_6(%arg0: i32) -> (i32, i32) {
    %c0_i32 = arith.constant 0 : i32
    %c0_i32_0 = arith.constant 0 : i32
    %c0_i32_1 = arith.constant 0 : i32
    return %c0_i32, %c0_i32_0 : i32, i32
  }
  func.func @transform_7(%arg0: i32) -> (i32, i32) {
    %c0_i32 = arith.constant 0 : i32
    %c0_i32_0 = arith.constant 0 : i32
    return %arg0, %c0_i32 : i32, i32
  }
}

</mosaic_0001>

<llo_original>
// kernel: tpu_custom_call.1
$region0: #{tpu_custom_call.1}
  #allocation0 [shape = 'u32[]', space=smem, size = 0x4, offset = 0x4, fixed_abs, tag = 'smem constant byte address 0x4 - core index']
  #allocation1 [shape = 'u32[144,128]{1,0:T(1,128)}', space=vmem, size = 0x12000, scoped, tag = 'internal scratch']
  %s0 = inlined_call_operand.hbm [shape: f32[2,1024], index: 0, kind: input, shape index: {}]
  %s1 = inlined_call_operand.hbm [shape: bf16[1024,128], index: 1, kind: input, shape index: {}]
  %s2 = inlined_call_operand.vmem [shape: f32[1,128], index: 2, kind: input, shape index: {}]
  %s3 = inlined_call_operand.hbm [shape: bf16[128,128], index: 3, kind: input, shape index: {}]
  %s4 = inlined_call_operand.vmem [shape: f32[1,128], index: 4, kind: input, shape index: {}]
  %s5 = inlined_call_operand.hbm [shape: bf16[128,128], index: 5, kind: input, shape index: {}]
  %s6 = inlined_call_operand.vmem [shape: f32[1,128], index: 6, kind: input, shape index: {}]
  %s7 = inlined_call_operand.hbm [shape: bf16[2,128], index: 7, kind: output, shape index: {}]
  %s8 = sld [smem:[#allocation0]]
  $region54: #{tpu_custom_call.1} parent=0
    _
  %s10 = ssub.s32 1, %s8
  %s11 = scalar_select 0, %s10, %s8
  $region1: #{tpu_custom_call.1} parent=0
    #allocation2 [shape = 'u8[8192]{0}', space=vmem, size = 0x2000, scoped, tag = 'input window, operand 0, single buffered']
    #allocation3 [shape = 's32[1]{0}', space=sflag, size = 0x4, scoped, tag = 'scoped memory for tpu_custom_call.1']
    #allocation4 [shape = 's32[1]{0}', space=sflag, size = 0x4, scoped, tag = 'scoped memory for tpu_custom_call.1']
    #allocation5 [shape = 'u8[262144]{0}', space=vmem, size = 0x40000, scoped, tag = 'input window, operand 1, single buffered']
    #allocation6 [shape = 's32[1]{0}', space=sflag, size = 0x4, scoped, tag = 'scoped memory for tpu_custom_call.1']
    #allocation7 [shape = 'u8[32768]{0}', space=vmem, size = 0x8000, scoped, tag = 'input window, operand 3, single buffered']
    #allocation8 [shape = 'u8[32768]{0}', space=vmem, size = 0x8000, scoped, tag = 'input window, operand 5, single buffered']
    #allocation9 [shape = 's32[1]{0}', space=sflag, size = 0x4, scoped, tag = 'scoped memory for tpu_custom_call.1']
    #allocation10 [shape = 'u8[512]{0}', space=vmem, size = 0x400, scoped, tag = 'output window, operand 0, single buffered']
    %12 = vsyncpa [#allocation3], 0
    %13 = vsyncpa [#allocation6], 0
    %14 = vsyncpa [#allocation9], 0
    %15 = vsyncpa [#allocation4], 0
    // Predicated region
    $region2: #{tpu_custom_call.1} parent=1 // pred_check
      _
    $region3: #{tpu_custom_call.1} parent=1 // pred_check_branch
      %17 = sbr.rel (0) target = $region5
    $region4: #{tpu_custom_call.1} parent=1 // pred_region
      %s19 = ssub.s32 256, 256
      %20 = vsyncadd [#allocation3], %s19
      %s22 = sshll.u32 [#allocation2], 4
      %s23 = int_to_ptr.vmem [resolvable:$true] %s22
      %25 = dma.hbm_to_vmem [thread:$0]  %s0, 256, %s23, [#allocation3]
    $region5: #{tpu_custom_call.1} parent=1 // pred_fallthru
      _
    // Predicated region
    $region6: #{tpu_custom_call.1} parent=1 // pred_check
      _
    $region7: #{tpu_custom_call.1} parent=1 // pred_check_branch
      %27 = sbr.rel (0) target = $region9
    $region8: #{tpu_custom_call.1} parent=1 // pred_region
      %s29 = ssub.s32 8192, 8192
      %30 = vsyncadd [#allocation6], %s29
      %s31 = sshll.u32 [#allocation5], 4
      %s32 = int_to_ptr.vmem [resolvable:$true] %s31
      %37 = dma.hbm_to_vmem [thread:$0]  %s1, 8192, %s32, [#allocation6], 64, 64, 4
    $region9: #{tpu_custom_call.1} parent=1 // pred_fallthru
      _
    // Predicated region
    $region10: #{tpu_custom_call.1} parent=1 // pred_check
      _
    $region11: #{tpu_custom_call.1} parent=1 // pred_check_branch
      %39 = sbr.rel (0) target = $region13
    $region12: #{tpu_custom_call.1} parent=1 // pred_region
      _
    $region13: #{tpu_custom_call.1} parent=1 // pred_fallthru
      _
    // Predicated region
    $region14: #{tpu_custom_call.1} parent=1 // pred_check
      _
    $region15: #{tpu_custom_call.1} parent=1 // pred_check_branch
      %41 = sbr.rel (0) target = $region17
    $region16: #{tpu_custom_call.1} parent=1 // pred_region
      %s43 = ssub.s32 1024, 1024
      %44 = vsyncadd [#allocation6], %s43
      %s45 = sshll.u32 [#allocation7], 4
      %s46 = int_to_ptr.vmem [resolvable:$true] %s45
      %51 = dma.hbm_to_vmem [thread:$0]  %s3, 1024, %s46, [#allocation6], 64, 64, 4
    $region17: #{tpu_custom_call.1} parent=1 // pred_fallthru
      _
    // Predicated region
    $region18: #{tpu_custom_call.1} parent=1 // pred_check
      _
    $region19: #{tpu_custom_call.1} parent=1 // pred_check_branch
      %53 = sbr.rel (0) target = $region21
    $region20: #{tpu_custom_call.1} parent=1 // pred_region
      _
    $region21: #{tpu_custom_call.1} parent=1 // pred_fallthru
      _
    // Predicated region
    $region22: #{tpu_custom_call.1} parent=1 // pred_check
      _
    $region23: #{tpu_custom_call.1} parent=1 // pred_check_branch
      %55 = sbr.rel (0) target = $region25
    $region24: #{tpu_custom_call.1} parent=1 // pred_region
      %s57 = ssub.s32 1024, 1024
      %58 = vsyncadd [#allocation9], %s57
      %s59 = sshll.u32 [#allocation8], 4
      %s60 = int_to_ptr.vmem [resolvable:$true] %s59
      %65 = dma.hbm_to_vmem [thread:$0]  %s5, 1024, %s60, [#allocation9], 64, 64, 4
    $region25: #{tpu_custom_call.1} parent=1 // pred_fallthru
      _
    // Predicated region
    $region26: #{tpu_custom_call.1} parent=1 // pred_check
      _
    $region27: #{tpu_custom_call.1} parent=1 // pred_check_branch
      %67 = sbr.rel (0) target = $region29
    $region28: #{tpu_custom_call.1} parent=1 // pred_region
      _
    $region29: #{tpu_custom_call.1} parent=1 // pred_fallthru
      _
    // Predicated region
    $region30: #{tpu_custom_call.1} parent=1 // pred_check
      _
    $region31: #{tpu_custom_call.1} parent=1 // pred_check_branch
      %69 = sbr.rel (0) target = $region33
    $region32: #{tpu_custom_call.1} parent=1 // pred_region
      %70 = dma.done [#allocation3], 256
    $region33: #{tpu_custom_call.1} parent=1 // pred_fallthru
      _
    // Predicated region
    $region34: #{tpu_custom_call.1} parent=1 // pred_check
      _
    $region35: #{tpu_custom_call.1} parent=1 // pred_check_branch
      %72 = sbr.rel (0) target = $region37
    $region36: #{tpu_custom_call.1} parent=1 // pred_region
      %73 = dma.done [#allocation6], 8192
    $region37: #{tpu_custom_call.1} parent=1 // pred_fallthru
      _
    // Predicated region
    $region38: #{tpu_custom_call.1} parent=1 // pred_check
      _
    $region39: #{tpu_custom_call.1} parent=1 // pred_check_branch
      %75 = sbr.rel (0) target = $region41
    $region40: #{tpu_custom_call.1} parent=1 // pred_region
      %76 = dma.done [#allocation6], 1024
    $region41: #{tpu_custom_call.1} parent=1 // pred_fallthru
      _
    // Predicated region
    $region42: #{tpu_custom_call.1} parent=1 // pred_check
      _
    $region43: #{tpu_custom_call.1} parent=1 // pred_check_branch
      %78 = sbr.rel (0) target = $region45
    $region44: #{tpu_custom_call.1} parent=1 // pred_region
      %79 = dma.done [#allocation9], 1024
    $region45: #{tpu_custom_call.1} parent=1 // pred_fallthru
      _
    %v81 = vld [vmem:[#allocation2] sm:$0xff]
    %v82 = vld [vmem:[#allocation2 + $0x8] sm:$0xff]
    %v85 = vcombine.high %v81, %v81
    %v87 = vunpack.c.l.s4 1983009808
    %v88 = vunpack.c.0.s8 %v87
    %v89 = vlaneseq
    %v90 = vshrl.u32 %v89, 7
    %v91 = vsub.s32 %v88, %v90
    %v92 = vrot.slane %v81, %v91
    %v94 = vunpack.c.l.s4 1983009808
    %v95 = vunpack.c.0.s8 %v94
    %v96 = vlaneseq
    %v97 = vshrl.u32 %v96, 7
    %v98 = vsub.s32 %v95, %v97
    %v99 = vrot.slane %v85, %v98
    %v100 = vcombine.high %v92, %v92
    %v101 = vcombine.high %v99, %v99
    %v102 = vcombine.high %v82, %v82
    %v104 = vunpack.c.l.s4 1983009808
    %v105 = vunpack.c.0.s8 %v104
    %v106 = vlaneseq
    %v107 = vshrl.u32 %v106, 7
    %v108 = vsub.s32 %v105, %v107
    %v109 = vrot.slane %v82, %v108
    %v111 = vunpack.c.l.s4 1983009808
    %v112 = vunpack.c.0.s8 %v111
    %v113 = vlaneseq
    %v114 = vshrl.u32 %v113, 7
    %v115 = vsub.s32 %v112, %v114
    %v116 = vrot.slane %v102, %v115
    %v117 = vcombine.high %v109, %v109
    %v118 = vcombine.high %v116, %v116
    %v127 = vpack.c.bf16 %v92, %v92
    %v128 = vpack.c.bf16 %v100, %v100
    %v129 = vpack.c.bf16 %v99, %v99
    %v130 = vpack.c.bf16 %v101, %v101
    %v131 = vpack.c.bf16 %v109, %v109
    %v132 = vpack.c.bf16 %v117, %v117
    %v133 = vpack.c.bf16 %v116, %v116
    %v134 = vpack.c.bf16 %v118, %v118
    %v135 = vld [vmem:[#allocation5] sm:$0xf]
    %v136 = vld [vmem:[#allocation5 + $0x4] sm:$0xf]
    %v137 = vld [vmem:[#allocation5 + $0x8] sm:$0xf]
    %v138 = vld [vmem:[#allocation5 + $0xc] sm:$0xf]
    %v139 = vld [vmem:[#allocation5 + $0x10] sm:$0xf]
    %v140 = vld [vmem:[#allocation5 + $0x14] sm:$0xf]
    %v141 = vld [vmem:[#allocation5 + $0x18] sm:$0xf]
    %v142 = vld [vmem:[#allocation5 + $0x1c] sm:$0xf]
    %v143 = vld [vmem:[#allocation5 + $0x20] sm:$0xf]
    %v144 = vld [vmem:[#allocation5 + $0x24] sm:$0xf]
    %v145 = vld [vmem:[#allocation5 + $0x28] sm:$0xf]
    %v146 = vld [vmem:[#allocation5 + $0x2c] sm:$0xf]
    %v147 = vld [vmem:[#allocation5 + $0x30] sm:$0xf]
    %v148 = vld [vmem:[#allocation5 + $0x34] sm:$0xf]
    %v149 = vld [vmem:[#allocation5 + $0x38] sm:$0xf]
    %v150 = vld [vmem:[#allocation5 + $0x3c] sm:$0xf]
    %v151 = vld [vmem:[#allocation5 + $0x40] sm:$0xf]
    %v152 = vld [vmem:[#allocation5 + $0x44] sm:$0xf]
    %v153 = vld [vmem:[#allocation5 + $0x48] sm:$0xf]
    %v154 = vld [vmem:[#allocation5 + $0x4c] sm:$0xf]
    %v155 = vld [vmem:[#allocation5 + $0x50] sm:$0xf]
    %v156 = vld [vmem:[#allocation5 + $0x54] sm:$0xf]
    %v157 = vld [vmem:[#allocation5 + $0x58] sm:$0xf]
    %v158 = vld [vmem:[#allocation5 + $0x5c] sm:$0xf]
    %v159 = vld [vmem:[#allocation5 + $0x60] sm:$0xf]
    %v160 = vld [vmem:[#allocation5 + $0x64] sm:$0xf]
    %v161 = vld [vmem:[#allocation5 + $0x68] sm:$0xf]
    %v162 = vld [vmem:[#allocation5 + $0x6c] sm:$0xf]
    %v163 = vld [vmem:[#allocation5 + $0x70] sm:$0xf]
    %v164 = vld [vmem:[#allocation5 + $0x74] sm:$0xf]
    %v165 = vld [vmem:[#allocation5 + $0x78] sm:$0xf]
    %v166 = vld [vmem:[#allocation5 + $0x7c] sm:$0xf]
    %v167 = vld [vmem:[#allocation5 + $0x80] sm:$0xf]
    %v168 = vld [vmem:[#allocation5 + $0x84] sm:$0xf]
    %v169 = vld [vmem:[#allocation5 + $0x88] sm:$0xf]
    %v170 = vld [vmem:[#allocation5 + $0x8c] sm:$0xf]
    %v171 = vld [vmem:[#allocation5 + $0x90] sm:$0xf]
    %v172 = vld [vmem:[#allocation5 + $0x94] sm:$0xf]
    %v173 = vld [vmem:[#allocation5 + $0x98] sm:$0xf]
    %v174 = vld [vmem:[#allocation5 + $0x9c] sm:$0xf]
    %v175 = vld [vmem:[#allocation5 + $0xa0] sm:$0xf]
    %v176 = vld [vmem:[#allocation5 + $0xa4] sm:$0xf]
    %v177 = vld [vmem:[#allocation5 + $0xa8] sm:$0xf]
    %v178 = vld [vmem:[#allocation5 + $0xac] sm:$0xf]
    %v179 = vld [vmem:[#allocation5 + $0xb0] sm:$0xf]
    %v180 = vld [vmem:[#allocation5 + $0xb4] sm:$0xf]
    %v181 = vld [vmem:[#allocation5 + $0xb8] sm:$0xf]
    %v182 = vld [vmem:[#allocation5 + $0xbc] sm:$0xf]
    %v183 = vld [vmem:[#allocation5 + $0xc0] sm:$0xf]
    %v184 = vld [vmem:[#allocation5 + $0xc4] sm:$0xf]
    %v185 = vld [vmem:[#allocation5 + $0xc8] sm:$0xf]
    %v186 = vld [vmem:[#allocation5 + $0xcc] sm:$0xf]
    %v187 = vld [vmem:[#allocation5 + $0xd0] sm:$0xf]
    %v188 = vld [vmem:[#allocation5 + $0xd4] sm:$0xf]
    %v189 = vld [vmem:[#allocation5 + $0xd8] sm:$0xf]
    %v190 = vld [vmem:[#allocation5 + $0xdc] sm:$0xf]
    %v191 = vld [vmem:[#allocation5 + $0xe0] sm:$0xf]
    %v192 = vld [vmem:[#allocation5 + $0xe4] sm:$0xf]
    %v193 = vld [vmem:[#allocation5 + $0xe8] sm:$0xf]
    %v194 = vld [vmem:[#allocation5 + $0xec] sm:$0xf]
    %v195 = vld [vmem:[#allocation5 + $0xf0] sm:$0xf]
    %v196 = vld [vmem:[#allocation5 + $0xf4] sm:$0xf]
    %v197 = vld [vmem:[#allocation5 + $0xf8] sm:$0xf]
    %v198 = vld [vmem:[#allocation5 + $0xfc] sm:$0xf]
    %v199 = vld [vmem:[#allocation5 + $0x100] sm:$0xf]
    %v200 = vld [vmem:[#allocation5 + $0x104] sm:$0xf]
    %v201 = vld [vmem:[#allocation5 + $0x108] sm:$0xf]
    %v202 = vld [vmem:[#allocation5 + $0x10c] sm:$0xf]
    %v203 = vld [vmem:[#allocation5 + $0x110] sm:$0xf]
    %v204 = vld [vmem:[#allocation5 + $0x114] sm:$0xf]
    %v205 = vld [vmem:[#allocation5 + $0x118] sm:$0xf]
    %v206 = vld [vmem:[#allocation5 + $0x11c] sm:$0xf]
    %v207 = vld [vmem:[#allocation5 + $0x120] sm:$0xf]
    %v208 = vld [vmem:[#allocation5 + $0x124] sm:$0xf]
    %v209 = vld [vmem:[#allocation5 + $0x128] sm:$0xf]
    %v210 = vld [vmem:[#allocation5 + $0x12c] sm:$0xf]
    %v211 = vld [vmem:[#allocation5 + $0x130] sm:$0xf]
    %v212 = vld [vmem:[#allocation5 + $0x134] sm:$0xf]
    %v213 = vld [vmem:[#allocation5 + $0x138] sm:$0xf]
    %v214 = vld [vmem:[#allocation5 + $0x13c] sm:$0xf]
    %v215 = vld [vmem:[#allocation5 + $0x140] sm:$0xf]
    %v216 = vld [vmem:[#allocation5 + $0x144] sm:$0xf]
    %v217 = vld [vmem:[#allocation5 + $0x148] sm:$0xf]
    %v218 = vld [vmem:[#allocation5 + $0x14c] sm:$0xf]
    %v219 = vld [vmem:[#allocation5 + $0x150] sm:$0xf]
    %v220 = vld [vmem:[#allocation5 + $0x154] sm:$0xf]
    %v221 = vld [vmem:[#allocation5 + $0x158] sm:$0xf]
    %v222 = vld [vmem:[#allocation5 + $0x15c] sm:$0xf]
    %v223 = vld [vmem:[#allocation5 + $0x160] sm:$0xf]
    %v224 = vld [vmem:[#allocation5 + $0x164] sm:$0xf]
    %v225 = vld [vmem:[#allocation5 + $0x168] sm:$0xf]
    %v226 = vld [vmem:[#allocation5 + $0x16c] sm:$0xf]
    %v227 = vld [vmem:[#allocation5 + $0x170] sm:$0xf]
    %v228 = vld [vmem:[#allocation5 + $0x174] sm:$0xf]
    %v229 = vld [vmem:[#allocation5 + $0x178] sm:$0xf]
    %v230 = vld [vmem:[#allocation5 + $0x17c] sm:$0xf]
    %v231 = vld [vmem:[#allocation5 + $0x180] sm:$0xf]
    %v232 = vld [vmem:[#allocation5 + $0x184] sm:$0xf]
    %v233 = vld [vmem:[#allocation5 + $0x188] sm:$0xf]
    %v234 = vld [vmem:[#allocation5 + $0x18c] sm:$0xf]
    %v235 = vld [vmem:[#allocation5 + $0x190] sm:$0xf]
    %v236 = vld [vmem:[#allocation5 + $0x194] sm:$0xf]
    %v237 = vld [vmem:[#allocation5 + $0x198] sm:$0xf]
    %v238 = vld [vmem:[#allocation5 + $0x19c] sm:$0xf]
    %v239 = vld [vmem:[#allocation5 + $0x1a0] sm:$0xf]
    %v240 = vld [vmem:[#allocation5 + $0x1a4] sm:$0xf]
    %v241 = vld [vmem:[#allocation5 + $0x1a8] sm:$0xf]
    %v242 = vld [vmem:[#allocation5 + $0x1ac] sm:$0xf]
    %v243 = vld [vmem:[#allocation5 + $0x1b0] sm:$0xf]
    %v244 = vld [vmem:[#allocation5 + $0x1b4] sm:$0xf]
    %v245 = vld [vmem:[#allocation5 + $0x1b8] sm:$0xf]
    %v246 = vld [vmem:[#allocation5 + $0x1bc] sm:$0xf]
    %v247 = vld [vmem:[#allocation5 + $0x1c0] sm:$0xf]
    %v248 = vld [vmem:[#allocation5 + $0x1c4] sm:$0xf]
    %v249 = vld [vmem:[#allocation5 + $0x1c8] sm:$0xf]
    %v250 = vld [vmem:[#allocation5 + $0x1cc] sm:$0xf]
    %v251 = vld [vmem:[#allocation5 + $0x1d0] sm:$0xf]
    %v252 = vld [vmem:[#allocation5 + $0x1d4] sm:$0xf]
    %v253 = vld [vmem:[#allocation5 + $0x1d8] sm:$0xf]
    %v254 = vld [vmem:[#allocation5 + $0x1dc] sm:$0xf]
    %v255 = vld [vmem:[#allocation5 + $0x1e0] sm:$0xf]
    %v256 = vld [vmem:[#allocation5 + $0x1e4] sm:$0xf]
    %v257 = vld [vmem:[#allocation5 + $0x1e8] sm:$0xf]
    %v258 = vld [vmem:[#allocation5 + $0x1ec] sm:$0xf]
    %v259 = vld [vmem:[#allocation5 + $0x1f0] sm:$0xf]
    %v260 = vld [vmem:[#allocation5 + $0x1f4] sm:$0xf]
    %v261 = vld [vmem:[#allocation5 + $0x1f8] sm:$0xf]
    %v262 = vld [vmem:[#allocation5 + $0x1fc] sm:$0xf]
    %v263 = vld [vmem:[%s2] sm:$0x1]
    %v265 = vlaneseq
    %v266 = vshrl.u32 %v265, 7
    %v267 = vsub.s32 0, %v266
    %v268 = vrot.slane %v263, %v267
    %v398 = vunpack.c.l.b16 %v135
    %v399 = vunpack.c.l.b16 %v136
    %v400 = vunpack.c.l.b16 %v137
    %v401 = vunpack.c.l.b16 %v138
    %v402 = vunpack.c.l.b16 %v139
    %v403 = vunpack.c.l.b16 %v140
    %v404 = vunpack.c.l.b16 %v141
    %v405 = vunpack.c.l.b16 %v142
    %v406 = vunpack.c.l.b16 %v143
    %v407 = vunpack.c.l.b16 %v144
    %v408 = vunpack.c.l.b16 %v145
    %v409 = vunpack.c.l.b16 %v146
    %v410 = vunpack.c.l.b16 %v147
    %v411 = vunpack.c.l.b16 %v148
    %v412 = vunpack.c.l.b16 %v149
    %v413 = vunpack.c.l.b16 %v150
    %v414 = vunpack.c.l.b16 %v151
    %v415 = vunpack.c.l.b16 %v152
    %v416 = vunpack.c.l.b16 %v153
    %v417 = vunpack.c.l.b16 %v154
    %v418 = vunpack.c.l.b16 %v155
    %v419 = vunpack.c.l.b16 %v156
    %v420 = vunpack.c.l.b16 %v157
    %v421 = vunpack.c.l.b16 %v158
    %v422 = vunpack.c.l.b16 %v159
    %v423 = vunpack.c.l.b16 %v160
    %v424 = vunpack.c.l.b16 %v161
    %v425 = vunpack.c.l.b16 %v162
    %v426 = vunpack.c.l.b16 %v163
    %v427 = vunpack.c.l.b16 %v164
    %v428 = vunpack.c.l.b16 %v165
    %v429 = vunpack.c.l.b16 %v166
    %v430 = vunpack.c.l.b16 %v167
    %v431 = vunpack.c.l.b16 %v168
    %v432 = vunpack.c.l.b16 %v169
    %v433 = vunpack.c.l.b16 %v170
    %v434 = vunpack.c.l.b16 %v171
    %v435 = vunpack.c.l.b16 %v172
    %v436 = vunpack.c.l.b16 %v173
    %v437 = vunpack.c.l.b16 %v174
    %v438 = vunpack.c.l.b16 %v175
    %v439 = vunpack.c.l.b16 %v176
    %v440 = vunpack.c.l.b16 %v177
    %v441 = vunpack.c.l.b16 %v178
    %v442 = vunpack.c.l.b16 %v179
    %v443 = vunpack.c.l.b16 %v180
    %v444 = vunpack.c.l.b16 %v181
    %v445 = vunpack.c.l.b16 %v182
    %v446 = vunpack.c.l.b16 %v183
    %v447 = vunpack.c.l.b16 %v184
    %v448 = vunpack.c.l.b16 %v185
    %v449 = vunpack.c.l.b16 %v186
    %v450 = vunpack.c.l.b16 %v187
    %v451 = vunpack.c.l.b16 %v188
    %v452 = vunpack.c.l.b16 %v189
    %v453 = vunpack.c.l.b16 %v190
    %v454 = vunpack.c.l.b16 %v191
    %v455 = vunpack.c.l.b16 %v192
    %v456 = vunpack.c.l.b16 %v193
    %v457 = vunpack.c.l.b16 %v194
    %v458 = vunpack.c.l.b16 %v195
    %v459 = vunpack.c.l.b16 %v196
    %v460 = vunpack.c.l.b16 %v197
    %v461 = vunpack.c.l.b16 %v198
    %v462 = vunpack.c.l.b16 %v199
    %v463 = vunpack.c.l.b16 %v200
    %v464 = vunpack.c.l.b16 %v201
    %v465 = vunpack.c.l.b16 %v202
    %v466 = vunpack.c.l.b16 %v203
    %v467 = vunpack.c.l.b16 %v204
    %v468 = vunpack.c.l.b16 %v205
    %v469 = vunpack.c.l.b16 %v206
    %v470 = vunpack.c.l.b16 %v207
    %v471 = vunpack.c.l.b16 %v208
    %v472 = vunpack.c.l.b16 %v209
    %v473 = vunpack.c.l.b16 %v210
    %v474 = vunpack.c.l.b16 %v211
    %v475 = vunpack.c.l.b16 %v212
    %v476 = vunpack.c.l.b16 %v213
    %v477 = vunpack.c.l.b16 %v214
    %v478 = vunpack.c.l.b16 %v215
    %v479 = vunpack.c.l.b16 %v216
    %v480 = vunpack.c.l.b16 %v217
    %v481 = vunpack.c.l.b16 %v218
    %v482 = vunpack.c.l.b16 %v219
    %v483 = vunpack.c.l.b16 %v220
    %v484 = vunpack.c.l.b16 %v221
    %v485 = vunpack.c.l.b16 %v222
    %v486 = vunpack.c.l.b16 %v223
    %v487 = vunpack.c.l.b16 %v224
    %v488 = vunpack.c.l.b16 %v225
    %v489 = vunpack.c.l.b16 %v226
    %v490 = vunpack.c.l.b16 %v227
    %v491 = vunpack.c.l.b16 %v228
    %v492 = vunpack.c.l.b16 %v229
    %v493 = vunpack.c.l.b16 %v230
    %v494 = vunpack.c.l.b16 %v231
    %v495 = vunpack.c.l.b16 %v232
    %v496 = vunpack.c.l.b16 %v233
    %v497 = vunpack.c.l.b16 %v234
    %v498 = vunpack.c.l.b16 %v235
    %v499 = vunpack.c.l.b16 %v236
    %v500 = vunpack.c.l.b16 %v237
    %v501 = vunpack.c.l.b16 %v238
    %v502 = vunpack.c.l.b16 %v239
    %v503 = vunpack.c.l.b16 %v240
    %v504 = vunpack.c.l.b16 %v241
    %v505 = vunpack.c.l.b16 %v242
    %v506 = vunpack.c.l.b16 %v243
    %v507 = vunpack.c.l.b16 %v244
    %v508 = vunpack.c.l.b16 %v245
    %v509 = vunpack.c.l.b16 %v246
    %v510 = vunpack.c.l.b16 %v247
    %v511 = vunpack.c.l.b16 %v248
    %v512 = vunpack.c.l.b16 %v249
    %v513 = vunpack.c.l.b16 %v250
    %v514 = vunpack.c.l.b16 %v251
    %v515 = vunpack.c.l.b16 %v252
    %v516 = vunpack.c.l.b16 %v253
    %v517 = vunpack.c.l.b16 %v254
    %v518 = vunpack.c.l.b16 %v255
    %v519 = vunpack.c.l.b16 %v256
    %v520 = vunpack.c.l.b16 %v257
    %v521 = vunpack.c.l.b16 %v258
    %v522 = vunpack.c.l.b16 %v259
    %v523 = vunpack.c.l.b16 %v260
    %v524 = vunpack.c.l.b16 %v261
    %v525 = vunpack.c.l.b16 %v262
    %v526 = vpack.c.b16 %v399, %v398
    %v527 = vpack.c.b16 %v401, %v400
    %v528 = vpack.c.b16 %v403, %v402
    %v529 = vpack.c.b16 %v405, %v404
    %v530 = vpack.c.b16 %v407, %v406
    %v531 = vpack.c.b16 %v409, %v408
    %v532 = vpack.c.b16 %v411, %v410
    %v533 = vpack.c.b16 %v413, %v412
    %v534 = vpack.c.b16 %v415, %v414
    %v535 = vpack.c.b16 %v417, %v416
    %v536 = vpack.c.b16 %v419, %v418
    %v537 = vpack.c.b16 %v421, %v420
    %v538 = vpack.c.b16 %v423, %v422
    %v539 = vpack.c.b16 %v425, %v424
    %v540 = vpack.c.b16 %v427, %v426
    %v541 = vpack.c.b16 %v429, %v428
    %v542 = vpack.c.b16 %v431, %v430
    %v543 = vpack.c.b16 %v433, %v432
    %v544 = vpack.c.b16 %v435, %v434
    %v545 = vpack.c.b16 %v437, %v436
    %v546 = vpack.c.b16 %v439, %v438
    %v547 = vpack.c.b16 %v441, %v440
    %v548 = vpack.c.b16 %v443, %v442
    %v549 = vpack.c.b16 %v445, %v444
    %v550 = vpack.c.b16 %v447, %v446
    %v551 = vpack.c.b16 %v449, %v448
    %v552 = vpack.c.b16 %v451, %v450
    %v553 = vpack.c.b16 %v453, %v452
    %v554 = vpack.c.b16 %v455, %v454
    %v555 = vpack.c.b16 %v457, %v456
    %v556 = vpack.c.b16 %v459, %v458
    %v557 = vpack.c.b16 %v461, %v460
    %v558 = vpack.c.b16 %v463, %v462
    %v559 = vpack.c.b16 %v465, %v464
    %v560 = vpack.c.b16 %v467, %v466
    %v561 = vpack.c.b16 %v469, %v468
    %v562 = vpack.c.b16 %v471, %v470
    %v563 = vpack.c.b16 %v473, %v472
    %v564 = vpack.c.b16 %v475, %v474
    %v565 = vpack.c.b16 %v477, %v476
    %v566 = vpack.c.b16 %v479, %v478
    %v567 = vpack.c.b16 %v481, %v480
    %v568 = vpack.c.b16 %v483, %v482
    %v569 = vpack.c.b16 %v485, %v484
    %v570 = vpack.c.b16 %v487, %v486
    %v571 = vpack.c.b16 %v489, %v488
    %v572 = vpack.c.b16 %v491, %v490
    %v573 = vpack.c.b16 %v493, %v492
    %v574 = vpack.c.b16 %v495, %v494
    %v575 = vpack.c.b16 %v497, %v496
    %v576 = vpack.c.b16 %v499, %v498
    %v577 = vpack.c.b16 %v501, %v500
    %v578 = vpack.c.b16 %v503, %v502
    %v579 = vpack.c.b16 %v505, %v504
    %v580 = vpack.c.b16 %v507, %v506
    %v581 = vpack.c.b16 %v509, %v508
    %v582 = vpack.c.b16 %v511, %v510
    %v583 = vpack.c.b16 %v513, %v512
    %v584 = vpack.c.b16 %v515, %v514
    %v585 = vpack.c.b16 %v517, %v516
    %v586 = vpack.c.b16 %v519, %v518
    %v587 = vpack.c.b16 %v521, %v520
    %v588 = vpack.c.b16 %v523, %v522
    %v589 = vpack.c.b16 %v525, %v524
    %654 = vmatprep.subr.bf16.mxu0 0
    %655 = vmatpush1.bf16.msra.mxu0 %v533
    %656 = vmatprep.subr.bf16.mxu0 0
    %657 = vmatpush1.bf16.msra.mxu0 %v532
    %658 = vmatprep.subr.bf16.mxu0 0
    %659 = vmatpush1.bf16.msra.mxu0 %v531
    %660 = vmatprep.subr.bf16.mxu0 0
    %661 = vmatpush1.bf16.msra.mxu0 %v530
    %662 = vmatprep.subr.bf16.mxu0 0
    %663 = vmatpush1.bf16.msra.mxu0 %v529
    %664 = vmatprep.subr.bf16.mxu0 0
    %665 = vmatpush1.bf16.msra.mxu0 %v528
    %666 = vmatprep.subr.bf16.mxu0 0
    %667 = vmatpush1.bf16.msra.mxu0 %v527
    %668 = vmatprep.subr.bf16.mxu0 0
    %669 = vmatpush1.bf16.msra.mxu0 %v526
    %670 = vmatprep.subr.bf16.mxu0 0
    %671 = vmatpush2.bf16.msra.mxu0 %v541
    %672 = vmatprep.subr.bf16.mxu0 0
    %673 = vmatpush2.bf16.msra.mxu0 %v540
    %674 = vmatprep.subr.bf16.mxu0 0
    %675 = vmatpush2.bf16.msra.mxu0 %v539
    %676 = vmatprep.subr.bf16.mxu0 0
    %677 = vmatpush2.bf16.msra.mxu0 %v538
    %678 = vmatprep.subr.bf16.mxu0 0
    %679 = vmatpush2.bf16.msra.mxu0 %v537
    %680 = vmatprep.subr.bf16.mxu0 0
    %681 = vmatpush2.bf16.msra.mxu0 %v536
    %682 = vmatprep.subr.bf16.mxu0 0
    %683 = vmatpush2.bf16.msra.mxu0 %v535
    %684 = vmatprep.subr.bf16.mxu0 0
    %685 = vmatpush2.bf16.msra.mxu0 %v534
    %686 = vmatprep.mubr.bf16.mxu0 %v128
    %687 = vmatmul.mubr.bf16.gmra.mxu0 %v127
    %v688 = vpop.f32.mrf.mxu0
    %v689 = vadd.f32 %v268, %v688
    %v690 = vpop.f32.mrf.mxu0
    %v691 = vpop.f32.mrf.mxu0
    %v692 = vpop.f32.mrf.mxu0
    %693 = vdwg.mxu0
    %694 = vmatprep.subr.bf16.mxu0 0
    %695 = vmatpush1.bf16.msra.mxu0 %v549
    %696 = vmatprep.subr.bf16.mxu0 0
    %697 = vmatpush1.bf16.msra.mxu0 %v548
    %698 = vmatprep.subr.bf16.mxu0 0
    %699 = vmatpush1.bf16.msra.mxu0 %v547
    %700 = vmatprep.subr.bf16.mxu0 0
    %701 = vmatpush1.bf16.msra.mxu0 %v546
    %702 = vmatprep.subr.bf16.mxu0 0
    %703 = vmatpush1.bf16.msra.mxu0 %v545
    %704 = vmatprep.subr.bf16.mxu0 0
    %705 = vmatpush1.bf16.msra.mxu0 %v544
    %706 = vmatprep.subr.bf16.mxu0 0
    %707 = vmatpush1.bf16.msra.mxu0 %v543
    %708 = vmatprep.subr.bf16.mxu0 0
    %709 = vmatpush1.bf16.msra.mxu0 %v542
    %710 = vmatprep.subr.bf16.mxu0 0
    %711 = vmatpush2.bf16.msra.mxu0 %v557
    %712 = vmatprep.subr.bf16.mxu0 0
    %713 = vmatpush2.bf16.msra.mxu0 %v556
    %714 = vmatprep.subr.bf16.mxu0 0
    %715 = vmatpush2.bf16.msra.mxu0 %v555
    %716 = vmatprep.subr.bf16.mxu0 0
    %717 = vmatpush2.bf16.msra.mxu0 %v554
    %718 = vmatprep.subr.bf16.mxu0 0
    %719 = vmatpush2.bf16.msra.mxu0 %v553
    %720 = vmatprep.subr.bf16.mxu0 0
    %721 = vmatpush2.bf16.msra.mxu0 %v552
    %722 = vmatprep.subr.bf16.mxu0 0
    %723 = vmatpush2.bf16.msra.mxu0 %v551
    %724 = vmatprep.subr.bf16.mxu0 0
    %725 = vmatpush2.bf16.msra.mxu0 %v550
    %726 = vmatprep.mubr.bf16.mxu0 %v130
    %727 = vmatmul.mubr.bf16.gmra.mxu0 %v129
    %v728 = vpop.f32.mrf.mxu0
    %v729 = vadd.f32 %v689, %v728
    %v730 = vpop.f32.mrf.mxu0
    %v731 = vpop.f32.mrf.mxu0
    %v732 = vpop.f32.mrf.mxu0
    %733 = vdwg.mxu0
    %734 = vmatprep.subr.bf16.mxu0 0
    %735 = vmatpush1.bf16.msra.mxu0 %v565
    %736 = vmatprep.subr.bf16.mxu0 0
    %737 = vmatpush1.bf16.msra.mxu0 %v564
    %738 = vmatprep.subr.bf16.mxu0 0
    %739 = vmatpush1.bf16.msra.mxu0 %v563
    %740 = vmatprep.subr.bf16.mxu0 0
    %741 = vmatpush1.bf16.msra.mxu0 %v562
    %742 = vmatprep.subr.bf16.mxu0 0
    %743 = vmatpush1.bf16.msra.mxu0 %v561
    %744 = vmatprep.subr.bf16.mxu0 0
    %745 = vmatpush1.bf16.msra.mxu0 %v560
    %746 = vmatprep.subr.bf16.mxu0 0
    %747 = vmatpush1.bf16.msra.mxu0 %v559
    %748 = vmatprep.subr.bf16.mxu0 0
    %749 = vmatpush1.bf16.msra.mxu0 %v558
    %750 = vmatprep.subr.bf16.mxu0 0
    %751 = vmatpush2.bf16.msra.mxu0 %v573
    %752 = vmatprep.subr.bf16.mxu0 0
    %753 = vmatpush2.bf16.msra.mxu0 %v572
    %754 = vmatprep.subr.bf16.mxu0 0
    %755 = vmatpush2.bf16.msra.mxu0 %v571
    %756 = vmatprep.subr.bf16.mxu0 0
    %757 = vmatpush2.bf16.msra.mxu0 %v570
    %758 = vmatprep.subr.bf16.mxu0 0
    %759 = vmatpush2.bf16.msra.mxu0 %v569
    %760 = vmatprep.subr.bf16.mxu0 0
    %761 = vmatpush2.bf16.msra.mxu0 %v568
    %762 = vmatprep.subr.bf16.mxu0 0
    %763 = vmatpush2.bf16.msra.mxu0 %v567
    %764 = vmatprep.subr.bf16.mxu0 0
    %765 = vmatpush2.bf16.msra.mxu0 %v566
    %766 = vmatprep.mubr.bf16.mxu0 %v132
    %767 = vmatmul.mubr.bf16.gmra.mxu0 %v131
    %v768 = vpop.f32.mrf.mxu0
    %v769 = vadd.f32 %v729, %v768
    %v770 = vpop.f32.mrf.mxu0
    %v771 = vpop.f32.mrf.mxu0
    %v772 = vpop.f32.mrf.mxu0
    %773 = vdwg.mxu0
    %774 = vmatprep.subr.bf16.mxu0 0
    %775 = vmatpush1.bf16.msra.mxu0 %v581
    %776 = vmatprep.subr.bf16.mxu0 0
    %777 = vmatpush1.bf16.msra.mxu0 %v580
    %778 = vmatprep.subr.bf16.mxu0 0
    %779 = vmatpush1.bf16.msra.mxu0 %v579
    %780 = vmatprep.subr.bf16.mxu0 0
    %781 = vmatpush1.bf16.msra.mxu0 %v578
    %782 = vmatprep.subr.bf16.mxu0 0
    %783 = vmatpush1.bf16.msra.mxu0 %v577
    %784 = vmatprep.subr.bf16.mxu0 0
    %785 = vmatpush1.bf16.msra.mxu0 %v576
    %786 = vmatprep.subr.bf16.mxu0 0
    %787 = vmatpush1.bf16.msra.mxu0 %v575
    %788 = vmatprep.subr.bf16.mxu0 0
    %789 = vmatpush1.bf16.msra.mxu0 %v574
    %790 = vmatprep.subr.bf16.mxu0 0
    %791 = vmatpush2.bf16.msra.mxu0 %v589
    %792 = vmatprep.subr.bf16.mxu0 0
    %793 = vmatpush2.bf16.msra.mxu0 %v588
    %794 = vmatprep.subr.bf16.mxu0 0
    %795 = vmatpush2.bf16.msra.mxu0 %v587
    %796 = vmatprep.subr.bf16.mxu0 0
    %797 = vmatpush2.bf16.msra.mxu0 %v586
    %798 = vmatprep.subr.bf16.mxu0 0
    %799 = vmatpush2.bf16.msra.mxu0 %v585
    %800 = vmatprep.subr.bf16.mxu0 0
    %801 = vmatpush2.bf16.msra.mxu0 %v584
    %802 = vmatprep.subr.bf16.mxu0 0
    %803 = vmatpush2.bf16.msra.mxu0 %v583
    %804 = vmatprep.subr.bf16.mxu0 0
    %805 = vmatpush2.bf16.msra.mxu0 %v582
    %806 = vmatprep.mubr.bf16.mxu0 %v134
    %807 = vmatmul.mubr.bf16.gmra.mxu0 %v133
    %v808 = vpop.f32.mrf.mxu0
    %v809 = vadd.f32 %v769, %v808
    %v810 = vpop.f32.mrf.mxu0
    %v811 = vpop.f32.mrf.mxu0
    %v812 = vpop.f32.mrf.mxu0
    %813 = vdwg.mxu0
    %v814 = vmax.f32 %v809, 0.0
    %v815 = vpack.c.bf16 %v814, %v814
    %v816 = vld [vmem:[#allocation7] sm:$0xf]
    %v817 = vld [vmem:[#allocation7 + $0x4] sm:$0xf]
    %v818 = vld [vmem:[#allocation7 + $0x8] sm:$0xf]
    %v819 = vld [vmem:[#allocation7 + $0xc] sm:$0xf]
    %v820 = vld [vmem:[#allocation7 + $0x10] sm:$0xf]
    %v821 = vld [vmem:[#allocation7 + $0x14] sm:$0xf]
    %v822 = vld [vmem:[#allocation7 + $0x18] sm:$0xf]
    %v823 = vld [vmem:[#allocation7 + $0x1c] sm:$0xf]
    %v824 = vld [vmem:[#allocation7 + $0x20] sm:$0xf]
    %v825 = vld [vmem:[#allocation7 + $0x24] sm:$0xf]
    %v826 = vld [vmem:[#allocation7 + $0x28] sm:$0xf]
    %v827 = vld [vmem:[#allocation7 + $0x2c] sm:$0xf]
    %v828 = vld [vmem:[#allocation7 + $0x30] sm:$0xf]
    %v829 = vld [vmem:[#allocation7 + $0x34] sm:$0xf]
    %v830 = vld [vmem:[#allocation7 + $0x38] sm:$0xf]
    %v831 = vld [vmem:[#allocation7 + $0x3c] sm:$0xf]
    %v832 = vld [vmem:[%s4] sm:$0x1]
    %v834 = vlaneseq
    %v835 = vshrl.u32 %v834, 7
    %v836 = vsub.s32 0, %v835
    %v837 = vrot.slane %v832, %v836
    %v855 = vunpack.c.l.b16 %v816
    %v856 = vunpack.c.l.b16 %v817
    %v857 = vunpack.c.l.b16 %v818
    %v858 = vunpack.c.l.b16 %v819
    %v859 = vunpack.c.l.b16 %v820
    %v860 = vunpack.c.l.b16 %v821
    %v861 = vunpack.c.l.b16 %v822
    %v862 = vunpack.c.l.b16 %v823
    %v863 = vunpack.c.l.b16 %v824
    %v864 = vunpack.c.l.b16 %v825
    %v865 = vunpack.c.l.b16 %v826
    %v866 = vunpack.c.l.b16 %v827
    %v867 = vunpack.c.l.b16 %v828
    %v868 = vunpack.c.l.b16 %v829
    %v869 = vunpack.c.l.b16 %v830
    %v870 = vunpack.c.l.b16 %v831
    %v871 = vpack.c.b16 %v856, %v855
    %v872 = vpack.c.b16 %v858, %v857
    %v873 = vpack.c.b16 %v860, %v859
    %v874 = vpack.c.b16 %v862, %v861
    %v875 = vpack.c.b16 %v864, %v863
    %v876 = vpack.c.b16 %v866, %v865
    %v877 = vpack.c.b16 %v868, %v867
    %v878 = vpack.c.b16 %v870, %v869
    %887 = vmatprep.subr.bf16.mxu0 0
    %888 = vmatpush1.bf16.msra.mxu0 %v878
    %889 = vmatprep.subr.bf16.mxu0 0
    %890 = vmatpush1.bf16.msra.mxu0 %v877
    %891 = vmatprep.subr.bf16.mxu0 0
    %892 = vmatpush1.bf16.msra.mxu0 %v876
    %893 = vmatprep.subr.bf16.mxu0 0
    %894 = vmatpush1.bf16.msra.mxu0 %v875
    %895 = vmatprep.subr.bf16.mxu0 0
    %896 = vmatpush1.bf16.msra.mxu0 %v874
    %897 = vmatprep.subr.bf16.mxu0 0
    %898 = vmatpush1.bf16.msra.mxu0 %v873
    %899 = vmatprep.subr.bf16.mxu0 0
    %900 = vmatpush1.bf16.msra.mxu0 %v872
    %901 = vmatprep.subr.bf16.mxu0 0
    %902 = vmatpush1.bf16.msra.mxu0 %v871
    %903 = vmatprep.subr.bf16.mxu0 0
    %904 = vmatpush2.bf16.msra.mxu0 0
    %905 = vmatprep.subr.bf16.mxu0 0
    %906 = vmatpush2.bf16.msra.mxu0 0
    %907 = vmatprep.subr.bf16.mxu0 0
    %908 = vmatpush2.bf16.msra.mxu0 0
    %909 = vmatprep.subr.bf16.mxu0 0
    %910 = vmatpush2.bf16.msra.mxu0 0
    %911 = vmatprep.subr.bf16.mxu0 0
    %912 = vmatpush2.bf16.msra.mxu0 0
    %913 = vmatprep.subr.bf16.mxu0 0
    %914 = vmatpush2.bf16.msra.mxu0 0
    %915 = vmatprep.subr.bf16.mxu0 0
    %916 = vmatpush2.bf16.msra.mxu0 0
    %917 = vmatprep.subr.bf16.mxu0 0
    %918 = vmatpush2.bf16.msra.mxu0 0
    %919 = vmatprep.mubr.bf16.mxu0 0
    %920 = vmatmul.mubr.bf16.gmra.mxu0 %v815
    %v921 = vpop.f32.mrf.mxu0
    %v922 = vadd.f32 %v837, %v921
    %v923 = vpop.f32.mrf.mxu0
    %v924 = vpop.f32.mrf.mxu0
    %v925 = vpop.f32.mrf.mxu0
    %926 = vdwg.mxu0
    %v927 = vmax.f32 %v922, 0.0
    %v928 = vpack.c.bf16 %v927, %v927
    %v929 = vld [vmem:[#allocation8] sm:$0xf]
    %v930 = vld [vmem:[#allocation8 + $0x4] sm:$0xf]
    %v931 = vld [vmem:[#allocation8 + $0x8] sm:$0xf]
    %v932 = vld [vmem:[#allocation8 + $0xc] sm:$0xf]
    %v933 = vld [vmem:[#allocation8 + $0x10] sm:$0xf]
    %v934 = vld [vmem:[#allocation8 + $0x14] sm:$0xf]
    %v935 = vld [vmem:[#allocation8 + $0x18] sm:$0xf]
    %v936 = vld [vmem:[#allocation8 + $0x1c] sm:$0xf]
    %v937 = vld [vmem:[#allocation8 + $0x20] sm:$0xf]
    %v938 = vld [vmem:[#allocation8 + $0x24] sm:$0xf]
    %v939 = vld [vmem:[#allocation8 + $0x28] sm:$0xf]
    %v940 = vld [vmem:[#allocation8 + $0x2c] sm:$0xf]
    %v941 = vld [vmem:[#allocation8 + $0x30] sm:$0xf]
    %v942 = vld [vmem:[#allocation8 + $0x34] sm:$0xf]
    %v943 = vld [vmem:[#allocation8 + $0x38] sm:$0xf]
    %v944 = vld [vmem:[#allocation8 + $0x3c] sm:$0xf]
    %v945 = vld [vmem:[%s6] sm:$0x1]
    %v947 = vlaneseq
    %v948 = vshrl.u32 %v947, 7
    %v949 = vsub.s32 0, %v948
    %v950 = vrot.slane %v945, %v949
    %v968 = vunpack.c.l.b16 %v929
    %v969 = vunpack.c.l.b16 %v930
    %v970 = vunpack.c.l.b16 %v931
    %v971 = vunpack.c.l.b16 %v932
    %v972 = vunpack.c.l.b16 %v933
    %v973 = vunpack.c.l.b16 %v934
    %v974 = vunpack.c.l.b16 %v935
    %v975 = vunpack.c.l.b16 %v936
    %v976 = vunpack.c.l.b16 %v937
    %v977 = vunpack.c.l.b16 %v938
    %v978 = vunpack.c.l.b16 %v939
    %v979 = vunpack.c.l.b16 %v940
    %v980 = vunpack.c.l.b16 %v941
    %v981 = vunpack.c.l.b16 %v942
    %v982 = vunpack.c.l.b16 %v943
    %v983 = vunpack.c.l.b16 %v944
    %v984 = vpack.c.b16 %v969, %v968
    %v985 = vpack.c.b16 %v971, %v970
    %v986 = vpack.c.b16 %v973, %v972
    %v987 = vpack.c.b16 %v975, %v974
    %v988 = vpack.c.b16 %v977, %v976
    %v989 = vpack.c.b16 %v979, %v978
    %v990 = vpack.c.b16 %v981, %v980
    %v991 = vpack.c.b16 %v983, %v982
    %1000 = vmatprep.subr.bf16.mxu0 0
    %1001 = vmatpush1.bf16.msra.mxu0 %v991
    %1002 = vmatprep.subr.bf16.mxu0 0
    %1003 = vmatpush1.bf16.msra.mxu0 %v990
    %1004 = vmatprep.subr.bf16.mxu0 0
    %1005 = vmatpush1.bf16.msra.mxu0 %v989
    %1006 = vmatprep.subr.bf16.mxu0 0
    %1007 = vmatpush1.bf16.msra.mxu0 %v988
    %1008 = vmatprep.subr.bf16.mxu0 0
    %1009 = vmatpush1.bf16.msra.mxu0 %v987
    %1010 = vmatprep.subr.bf16.mxu0 0
    %1011 = vmatpush1.bf16.msra.mxu0 %v986
    %1012 = vmatprep.subr.bf16.mxu0 0
    %1013 = vmatpush1.bf16.msra.mxu0 %v985
    %1014 = vmatprep.subr.bf16.mxu0 0
    %1015 = vmatpush1.bf16.msra.mxu0 %v984
    %1016 = vmatprep.subr.bf16.mxu0 0
    %1017 = vmatpush2.bf16.msra.mxu0 0
    %1018 = vmatprep.subr.bf16.mxu0 0
    %1019 = vmatpush2.bf16.msra.mxu0 0
    %1020 = vmatprep.subr.bf16.mxu0 0
    %1021 = vmatpush2.bf16.msra.mxu0 0
    %1022 = vmatprep.subr.bf16.mxu0 0
    %1023 = vmatpush2.bf16.msra.mxu0 0
    %1024 = vmatprep.subr.bf16.mxu0 0
    %1025 = vmatpush2.bf16.msra.mxu0 0
    %1026 = vmatprep.subr.bf16.mxu0 0
    %1027 = vmatpush2.bf16.msra.mxu0 0
    %1028 = vmatprep.subr.bf16.mxu0 0
    %1029 = vmatpush2.bf16.msra.mxu0 0
    %1030 = vmatprep.subr.bf16.mxu0 0
    %1031 = vmatpush2.bf16.msra.mxu0 0
    %1032 = vmatprep.mubr.bf16.mxu0 0
    %1033 = vmatmul.mubr.bf16.gmra.mxu0 %v928
    %v1034 = vpop.f32.mrf.mxu0
    %v1035 = vadd.f32 %v950, %v1034
    %v1036 = vpop.f32.mrf.mxu0
    %v1037 = vpop.f32.mrf.mxu0
    %v1038 = vpop.f32.mrf.mxu0
    %1039 = vdwg.mxu0
    %v1040 = vpack.c.bf16 %v1035, %v1035
    %1041 = vst [vmem:[#allocation10] sm:$0x1] %v1040
    // Predicated region
    $region46: #{tpu_custom_call.1} parent=1 // pred_check
      _
    $region47: #{tpu_custom_call.1} parent=1 // pred_check_branch
      %1043 = sbr.rel (0) target = $region49
    $region48: #{tpu_custom_call.1} parent=1 // pred_region
      %s1045 = ssub.s32 16, 16
      %1046 = vsyncadd [#allocation4], %s1045
      %s1048 = sshll.u32 [#allocation10], 4
      %s1049 = int_to_ptr.vmem [resolvable:$true] %s1048
      %1051 = dma.vmem_to_hbm [thread:$0]  %s1049, 16, %s7, [#allocation4]
    $region49: #{tpu_custom_call.1} parent=1 // pred_fallthru
      _
    // Predicated region
    $region50: #{tpu_custom_call.1} parent=1 // pred_check
      _
    $region51: #{tpu_custom_call.1} parent=1 // pred_check_branch
      %1053 = sbr.rel (0) target = $region53
    $region52: #{tpu_custom_call.1} parent=1 // pred_region
      %1054 = dma.done [#allocation4], 16
    $region53: #{tpu_custom_call.1} parent=1 // pred_fallthru
      _
    %1055 = vsyncpa [#allocation3], 1
    %1056 = vsyncpa [#allocation6], 1
    %1057 = vsyncpa [#allocation9], 1
    %1058 = vsyncpa [#allocation4], 1

</llo_original>
